<compile_context>
chip_gen: v5e
topology: v5e:2x2
jax: 0.10.0
libtpu: 0.0.40
codegen_flags: <defaults>
</compile_context>

<pallas_src>
import functools

import jax
import jax.numpy as jnp
from jax.experimental import pallas as pl
from jax.experimental.pallas import tpu as pltpu


# ---------------------------------------------------------------------------
# Pass 1: MLP   h = PReLU([seq1 ; seq2] @ W_fc^T + b_fc + b_mlp)
# ---------------------------------------------------------------------------
def _mlp_kernel(seq1_ref, seq2_ref, wfcT_ref, bmlp_ref, prelu_ref,
                h1f_ref, h2f_ref, h1b_ref):
    a = prelu_ref[0]                                       # PReLU slope (SMEM)
    tm = seq1_ref.shape[0]
    # Stack the two views in-kernel -> one MXU matmul covers seq1+seq2.
    x12 = jnp.concatenate([seq1_ref[...], seq2_ref[...]], axis=0)
    y = jnp.dot(x12.astype(jnp.bfloat16), wfcT_ref[...],
                preferred_element_type=jnp.float32) + bmlp_ref[...]
    h = jnp.where(y > 0, y, a * y)                         # PReLU (f32 VPU)
    h1 = h[:tm]
    h2 = h[tm:]
    h1f_ref[...] = h1                                      # f32, for discriminator
    h2f_ref[...] = h2
    h1b_ref[...] = h1.astype(jnp.bfloat16)                 # bf16, for A @ h1


# ---------------------------------------------------------------------------
# Pass 2 (row-tiled over A): GCN aggregation + projection + sigmoid + bilinear
# ---------------------------------------------------------------------------
def _gcn_disc_kernel(A_ref, h1b_ref, h1f_ref, h2f_ref, wgcnT_ref, bgcn_ref,
                     wbilT_ref, bbil_ref, hn1_ref, sc_ref):
    b = bbil_ref[0]                                        # bilinear bias (SMEM)

    # GCN (dropout is identity at inference): hn1 = (A @ h1) @ W_gcn^T + b_gcn
    ah1 = jnp.dot(A_ref[...], h1b_ref[...],
                  preferred_element_type=jnp.float32)              # (TM, H)
    hn1 = jnp.dot(ah1.astype(jnp.bfloat16), wgcnT_ref[...],
                  preferred_element_type=jnp.float32) + bgcn_ref[...]

    # Discriminator context c = sigmoid(hn1)   (EUP)
    X = jax.nn.sigmoid(hn1)

    # nn.Bilinear(n_h, n_h, 1): sc[n] = h[n] @ W_bil @ X[n] + b
    #   == sum(h[n] * (X[n] @ W_bil^T), -1): ONE shared MXU matmul, then two
    #   lane reductions written as a single lane-dense (2, TM) tile.
    xw = jnp.dot(X.astype(jnp.bfloat16), wbilT_ref[...],
                 preferred_element_type=jnp.float32)               # (TM, H)
    h12 = jnp.stack([h1f_ref[...], h2f_ref[...]], axis=0)          # (2, TM, H)
    sc = jnp.sum(h12 * xw[None, :, :], axis=-1) + b                # (2, TM)

    hn1_ref[...] = hn1.astype(hn1_ref.dtype)
    sc_ref[...] = sc


# ---------------------------------------------------------------------------
# Helpers (all run at trace time / outside the hot path)
# ---------------------------------------------------------------------------
def _vmem_limit_bytes():
    """Per-generation VMEM budget (v5e/v6e: ~96 MiB, v7x: ~48 MiB)."""
    cap = 64 * 1024 * 1024                 # conservative default (v7x per-TC)
    try:
        cap = int(pltpu.get_tpu_info().vmem_capacity_bytes)
    except Exception:
        pass
    return int(min(100 * 1024 * 1024, cap * 3 // 4))


def _pick_row_tile(n, vmem_limit):
    """Largest row tile keeping ~3 A-buffers under half the VMEM budget."""
    if n <= 512:
        return n
    a_budget = vmem_limit // 2
    max_rows = min(2048, max(128, a_budget // (3 * n * 2)), n)
    tm = (max_rows // 128) * 128
    while tm >= 128:
        if n % tm == 0:
            return tm
        tm -= 128
    # TODO(synk): pad N to a multiple of 128 for ragged graphs; fall back to a
    #             single resident row block for now.
    return n


def _a_block_spec(tm, n, n_blocks):
    """A row-block spec; 3-deep pipeline when the grid is deep enough."""
    if n_blocks >= 3:
        try:
            return pl.BlockSpec((tm, n), lambda i: (i, 0),
                                pipeline_mode=pl.Buffered(3))
        except Exception:   # older jax without pipeline_mode / Buffered
            pass
    return pl.BlockSpec((tm, n), lambda i: (i, 0))


def prepare_params(params):
    """One-time weight prep (transpose / cast) OUTSIDE the jitted hot path."""
    H = params["w_fc"].shape[0]
    b_fc = params.get("b_fc", jnp.zeros((H,), jnp.float32))
    b_mlp = params.get("b_mlp", jnp.zeros((H,), jnp.float32))
    return {
        "wfcT": params["w_fc"].T.astype(jnp.bfloat16),              # (H, H)
        "bmlp": (b_fc + b_mlp).reshape(1, H).astype(jnp.float32),   # (1, H)
        "prelu": params["prelu_a"].reshape(1).astype(jnp.float32),  # (1,) SMEM
        "wgcnT": params["w_gcn"].T.astype(jnp.bfloat16),            # (H, H)
        "bgcn": params["b_gcn"].reshape(1, H).astype(jnp.float32),  # (1, H)
        "wbilT": params["w_bil"].T.astype(jnp.bfloat16),            # (H, H)
        "bbil": params["b_bil"].reshape(1).astype(jnp.float32),     # (1,) SMEM
    }


_SMEM = pltpu.MemorySpace.SMEM


@functools.partial(jax.jit, static_argnames=("k", "hn1_dtype"))
def index_select_forward(seq1, seq2, A, prepared, k, hn1_dtype=jnp.float32):
    N, H = seq1.shape

    # A should be pre-cast to bf16 once at graph-load time (hot-path hoist);
    # fall back to an in-jit cast only if the caller passes f32.
    if A.dtype != jnp.bfloat16:
        A = A.astype(jnp.bfloat16)

    vmem_limit = _vmem_limit_bytes()
    tm = _pick_row_tile(N, vmem_limit)
    n_blocks = N // tm

    const_hh = pl.BlockSpec((H, H), lambda i: (0, 0))     # resident weights
    const_1h = pl.BlockSpec((1, H), lambda i: (0, 0))     # resident bias rows
    smem_1 = pl.BlockSpec((1,), lambda i: (0,), memory_space=_SMEM)
    row_nh = pl.BlockSpec((tm, H), lambda i: (i, 0))      # row-blocked (N, H)

    cparams = pltpu.CompilerParams(
        dimension_semantics=("parallel",),   # 2-TC sharding on v7x megacore
        vmem_limit_bytes=vmem_limit)

    # ---- Pass 1: MLP on row blocks of [seq1 ; seq2] -------------------------
    h1f, h2f, h1b = pl.pallas_call(
        _mlp_kernel,
        grid=(n_blocks,),
        in_specs=[row_nh, row_nh, const_hh, const_1h, smem_1],
        out_specs=(row_nh, row_nh, row_nh),
        out_shape=(
            jax.ShapeDtypeStruct((N, H), jnp.float32),    # h1 (f32)
            jax.ShapeDtypeStruct((N, H), jnp.float32),    # h2 (f32)
            jax.ShapeDtypeStruct((N, H), jnp.bfloat16),   # h1 (bf16 for A @ h1)
        ),
        compiler_params=cparams,
        cost_estimate=pl.CostEstimate(
            flops=2 * (2 * N) * H * H,
            transcendentals=0,
            bytes_accessed=(2 * N * H * 4 + H * H * 2 + H * 4
                            + 2 * N * H * 4 + N * H * 2)),
    )(seq1, seq2, prepared["wfcT"], prepared["bmlp"], prepared["prelu"])

    # ---- Pass 2: row-tiled GCN aggregation + projection + discriminator ----
    hn1_bytes = jnp.dtype(hn1_dtype).itemsize
    hn1, sc = pl.pallas_call(
        _gcn_disc_kernel,
        grid=(n_blocks,),
        in_specs=[
            _a_block_spec(tm, N, n_blocks),               # A row blocks (streamed)
            pl.BlockSpec((N, H), lambda i: (0, 0)),       # h1 bf16, resident
            row_nh, row_nh,                               # h1 / h2 f32 row blocks
            const_hh, const_1h, const_hh,                 # wgcnT, bgcn, wbilT
            smem_1,                                       # bilinear bias (SMEM)
        ],
        out_specs=(
            row_nh,                                       # hn1 row blocks
            pl.BlockSpec((2, tm), lambda i: (0, i)),      # lane-dense scores
        ),
        out_shape=(
            jax.ShapeDtypeStruct((N, H), hn1_dtype),
            jax.ShapeDtypeStruct((2, N), jnp.float32),
        ),
        compiler_params=cparams,
        cost_estimate=pl.CostEstimate(
            flops=2 * N * N * H + 4 * N * H * H,
            transcendentals=N * H,
            bytes_accessed=(N * N * 2 + N * H * 2 + 2 * N * H * 4
                            + 2 * H * H * 2 + H * 4
                            + N * H * hn1_bytes + 2 * N * 4)),
    )(A, h1b, h1f, h2f, prepared["wgcnT"], prepared["bgcn"],
      prepared["wbilT"], prepared["bbil"])

    # ---- cheap glue (plain JAX) --------------------------------------------
    ret = sc.reshape(2 * N)                # [sc1_rows ; sc2_rows], no transpose
    ret_true = ret[:N]
    scores = jax.nn.sigmoid(ret_true)
    # TODO(synk): top-k ordering stays in plain JAX (no clean Pallas sort).
    values, idx = jax.lax.top_k(scores, N)
    kk = int(k * N)
    return ret, values[:kk], idx[:kk], idx[kk:], hn1


# ---------------------------------------------------------------------------
# Pure-JAX f32 reference (mirrors the PyTorch module) + demo driver
# ---------------------------------------------------------------------------
def _reference(seq1, seq2, A, params):
    a = params["prelu_a"]
    b = params.get("b_fc", 0.0) + params.get("b_mlp", 0.0)

    def mlp(x):
        y = x @ params["w_fc"].T + b
        return jnp.where(y > 0, y, a * y)

    h1, h2 = mlp(seq1), mlp(seq2)
    hn1 = (A @ h1) @ params["w_gcn"].T + params["b_gcn"]
    X = jax.nn.sigmoid(hn1)
    sc1 = jnp.sum((h1 @ params["w_bil"]) * X, axis=-1) + params["b_bil"]
    sc2 = jnp.sum((h2 @ params["w_bil"]) * X, axis=-1) + params["b_bil"]
    return jnp.concatenate([sc1, sc2], axis=0), hn1


def _xavier_uniform(key, shape):
    fan_in, fan_out = shape[-1], shape[-2]
    limit = (6.0 / (fan_in + fan_out)) ** 0.5
    return jax.random.uniform(key, shape, jnp.float32, -limit, limit)


if __name__ == "__main__":
    N, H = 8, 32            # num_nodes, n_h
    k = 0.5

    key = jax.random.PRNGKey(0)
    ks = jax.random.split(key, 8)

    seq1 = jax.random.normal(ks[0], (N, H), jnp.float32)
    seq2 = jax.random.normal(ks[1], (N, H), jnp.float32)
    A = jax.random.uniform(ks[2], (N, N), jnp.float32)

    params = {
        # MLP: fc Linear(n_h, n_h), xavier weight / zero bias; extra MLP bias
        # zero-initialised; PReLU slope 0.25
        "w_fc": _xavier_uniform(ks[3], (H, H)),
        "b_fc": jnp.zeros((H,), jnp.float32),
        "b_mlp": jnp.zeros((H,), jnp.float32),
        "prelu_a": jnp.array(0.25, jnp.float32),
        # GCN proj Linear(n_h, n_h)
        "w_gcn": _xavier_uniform(ks[4], (H, H)),
        "b_gcn": 0.01 * jax.random.normal(ks[5], (H,), jnp.float32),
        # Discriminator Bilinear(n_h, n_h, 1): xavier weight, zero bias
        "w_bil": _xavier_uniform(ks[6], (H, H)),
        "b_bil": jnp.array(0.0, jnp.float32),
    }

    # One-time prep OUTSIDE the jitted hot path (review: hoist casts/concats).
    prepared = prepare_params(params)
    A_bf16 = A.astype(jnp.bfloat16)        # graph-load-time cast of A

    ret, values1, idx1, idx0, h_n1 = index_select_forward(
        seq1, seq2, A_bf16, prepared, k=k)
    jax.block_until_ready((ret, values1, idx1, idx0, h_n1))

    assert ret.shape == (2 * N,)
    assert values1.shape == (int(k * N),)
    assert idx1.shape == (int(k * N),)
    assert idx0.shape == (N - int(k * N),)
    assert h_n1.shape == (N, H)

    # Loose numerical check vs a pure-JAX f32 reference (kernel uses bf16 MXU
    # operands with f32 accumulation, so allow a generous tolerance).
    ret_ref, hn1_ref = _reference(seq1, seq2, A, params)
    assert float(jnp.max(jnp.abs(ret - ret_ref))) < 0.5
    assert float(jnp.max(jnp.abs(h_n1 - hn1_ref))) < 0.5

    print("KERNEL_OK")
</pallas_src>

<mosaic_0001>
module attributes {stable_mosaic.version = 11 : i64} {
  func.func @_mlp_kernel(%arg0: i32, %arg1: memref<8x32xf32, #tpu.memory_space<vmem>>, %arg2: memref<8x32xf32, #tpu.memory_space<vmem>>, %arg3: memref<32x32xbf16, #tpu.memory_space<vmem>>, %arg4: memref<1x32xf32, #tpu.memory_space<vmem>>, %arg5: memref<1xf32, #tpu.memory_space<smem>>, %arg6: memref<8x32xf32, #tpu.memory_space<vmem>>, %arg7: memref<8x32xf32, #tpu.memory_space<vmem>>, %arg8: memref<8x32xbf16, #tpu.memory_space<vmem>>) attributes {dimension_semantics = [#tpu.dimension_semantics<parallel>], iteration_bounds = array<i64: 1>, scalar_prefetch = 0 : i64, scratch_operands = 0 : i64, tpu.core_type = #tpu.core_type<tc>, window_params = [{transform_indices = @transform_0, window_bounds = array<i64: 8, 32>}, {transform_indices = @transform_1, window_bounds = array<i64: 8, 32>}, {pipeline_mode = #tpu.pipeline_mode<synchronous>, transform_indices = @transform_2, window_bounds = array<i64: 32, 32>}, {pipeline_mode = #tpu.pipeline_mode<synchronous>, transform_indices = @transform_3, window_bounds = array<i64: 1, 32>}, {transform_indices = @transform_4, window_bounds = array<i64: 1>}, {transform_indices = @transform_5, window_bounds = array<i64: 8, 32>}, {transform_indices = @transform_6, window_bounds = array<i64: 8, 32>}, {transform_indices = @transform_7, window_bounds = array<i64: 8, 32>}]} {
    %c0 = arith.constant 0 : index
    %0 = memref.load %arg5[%c0] : memref<1xf32, #tpu.memory_space<smem>>
    %c0_0 = arith.constant 0 : index
    %c0_1 = arith.constant 0 : index
    %1 = vector.load %arg1[%c0_0, %c0_1] : memref<8x32xf32, #tpu.memory_space<vmem>>, vector<8x32xf32>
    %c0_2 = arith.constant 0 : index
    %c0_3 = arith.constant 0 : index
    %2 = vector.load %arg2[%c0_2, %c0_3] : memref<8x32xf32, #tpu.memory_space<vmem>>, vector<8x32xf32>
    %3 = tpu.concatenate %1, %2 in 0 : vector<8x32xf32>, vector<8x32xf32> -> vector<16x32xf32>
    %4 = arith.truncf %3 : vector<16x32xf32> to vector<16x32xbf16>
    %c0_4 = arith.constant 0 : index
    %c0_5 = arith.constant 0 : index
    %5 = vector.load %arg3[%c0_4, %c0_5] : memref<32x32xbf16, #tpu.memory_space<vmem>>, vector<32x32xbf16>
    %cst = arith.constant dense<0.000000e+00> : vector<16x32xf32>
    %6 = tpu.matmul %4, %5, %cst {dimension_numbers = #tpu.dot_dimension_numbers<[1], [0], [0], [1], [0, 0, 1, 1], [], []>} : vector<16x32xbf16>, vector<32x32xbf16>, vector<16x32xf32> -> vector<16x32xf32>
    %c0_6 = arith.constant 0 : index
    %c0_7 = arith.constant 0 : index
    %7 = vector.load %arg4[%c0_6, %c0_7] : memref<1x32xf32, #tpu.memory_space<vmem>>, vector<1x32xf32>
    %8 = vector.broadcast %7 : vector<1x32xf32> to vector<16x32xf32>
    %9 = arith.addf %6, %8 : vector<16x32xf32>
    %cst_8 = arith.constant 0.000000e+00 : f32
    %10 = vector.broadcast %cst_8 : f32 to vector<16x32xf32>
    %11 = arith.cmpf ogt, %9, %10 : vector<16x32xf32>
    %12 = vector.broadcast %0 : f32 to vector<16x32xf32>
    %13 = arith.mulf %12, %9 : vector<16x32xf32>
    %14 = arith.select %11, %9, %13 : vector<16x32xi1>, vector<16x32xf32>
    %15 = vector.extract_strided_slice %14 {offsets = [0, 0], sizes = [8, 32], strides = [1, 1]} : vector<16x32xf32> to vector<8x32xf32>
    %16 = vector.extract_strided_slice %14 {offsets = [8, 0], sizes = [8, 32], strides = [1, 1]} : vector<16x32xf32> to vector<8x32xf32>
    %c0_9 = arith.constant 0 : index
    %c0_10 = arith.constant 0 : index
    %17 = vector.load %arg6[%c0_9, %c0_10] : memref<8x32xf32, #tpu.memory_space<vmem>>, vector<8x32xf32>
    tpu.vector_store %arg6[%c0_9, %c0_10], %15 {strides = array<i32>} : memref<8x32xf32, #tpu.memory_space<vmem>>, vector<8x32xf32>,
    %c0_11 = arith.constant 0 : index
    %c0_12 = arith.constant 0 : index
    %18 = vector.load %arg7[%c0_11, %c0_12] : memref<8x32xf32, #tpu.memory_space<vmem>>, vector<8x32xf32>
    tpu.vector_store %arg7[%c0_11, %c0_12], %16 {strides = array<i32>} : memref<8x32xf32, #tpu.memory_space<vmem>>, vector<8x32xf32>,
    %19 = arith.truncf %15 : vector<8x32xf32> to vector<8x32xbf16>
    %c0_13 = arith.constant 0 : index
    %c0_14 = arith.constant 0 : index
    %20 = vector.load %arg8[%c0_13, %c0_14] : memref<8x32xbf16, #tpu.memory_space<vmem>>, vector<8x32xbf16>
    tpu.vector_store %arg8[%c0_13, %c0_14], %19 {strides = array<i32>} : memref<8x32xbf16, #tpu.memory_space<vmem>>, vector<8x32xbf16>,
    return
  }
  func.func @transform_0(%arg0: i32) -> (i32, i32) {
    %c0_i32 = arith.constant 0 : i32
    %c0_i32_0 = arith.constant 0 : i32
    return %arg0, %c0_i32 : i32, i32
  }
  func.func @transform_1(%arg0: i32) -> (i32, i32) {
    %c0_i32 = arith.constant 0 : i32
    %c0_i32_0 = arith.constant 0 : i32
    return %arg0, %c0_i32 : i32, i32
  }
  func.func @transform_2(%arg0: i32) -> (i32, i32) {
    %c0_i32 = arith.constant 0 : i32
    %c0_i32_0 = arith.constant 0 : i32
    %c0_i32_1 = arith.constant 0 : i32
    return %c0_i32, %c0_i32_0 : i32, i32
  }
  func.func @transform_3(%arg0: i32) -> (i32, i32) {
    %c0_i32 = arith.constant 0 : i32
    %c0_i32_0 = arith.constant 0 : i32
    %c0_i32_1 = arith.constant 0 : i32
    return %c0_i32, %c0_i32_0 : i32, i32
  }
  func.func @transform_4(%arg0: i32) -> i32 {
    %c0_i32 = arith.constant 0 : i32
    %c0_i32_0 = arith.constant 0 : i32
    return %c0_i32 : i32
  }
  func.func @transform_5(%arg0: i32) -> (i32, i32) {
    %c0_i32 = arith.constant 0 : i32
    %c0_i32_0 = arith.constant 0 : i32
    return %arg0, %c0_i32 : i32, i32
  }
  func.func @transform_6(%arg0: i32) -> (i32, i32) {
    %c0_i32 = arith.constant 0 : i32
    %c0_i32_0 = arith.constant 0 : i32
    return %arg0, %c0_i32 : i32, i32
  }
  func.func @transform_7(%arg0: i32) -> (i32, i32) {
    %c0_i32 = arith.constant 0 : i32
    %c0_i32_0 = arith.constant 0 : i32
    return %arg0, %c0_i32 : i32, i32
  }
}

module attributes {stable_mosaic.version = 11 : i64} {
  func.func @_gcn_disc_kernel(%arg0: i32, %arg1: memref<8x8xbf16, #tpu.memory_space<vmem>>, %arg2: memref<8x32xbf16, #tpu.memory_space<vmem>>, %arg3: memref<8x32xf32, #tpu.memory_space<vmem>>, %arg4: memref<8x32xf32, #tpu.memory_space<vmem>>, %arg5: memref<32x32xbf16, #tpu.memory_space<vmem>>, %arg6: memref<1x32xf32, #tpu.memory_space<vmem>>, %arg7: memref<32x32xbf16, #tpu.memory_space<vmem>>, %arg8: memref<1xf32, #tpu.memory_space<smem>>, %arg9: memref<8x32xf32, #tpu.memory_space<vmem>>, %arg10: memref<2x8xf32, #tpu.memory_space<vmem>>) attributes {dimension_semantics = [#tpu.dimension_semantics<parallel>], iteration_bounds = array<i64: 1>, scalar_prefetch = 0 : i64, scratch_operands = 0 : i64, tpu.core_type = #tpu.core_type<tc>, window_params = [{transform_indices = @transform_0, window_bounds = array<i64: 8, 8>}, {pipeline_mode = #tpu.pipeline_mode<synchronous>, transform_indices = @transform_1, window_bounds = array<i64: 8, 32>}, {transform_indices = @transform_2, window_bounds = array<i64: 8, 32>}, {transform_indices = @transform_3, window_bounds = array<i64: 8, 32>}, {pipeline_mode = #tpu.pipeline_mode<synchronous>, transform_indices = @transform_4, window_bounds = array<i64: 32, 32>}, {pipeline_mode = #tpu.pipeline_mode<synchronous>, transform_indices = @transform_5, window_bounds = array<i64: 1, 32>}, {pipeline_mode = #tpu.pipeline_mode<synchronous>, transform_indices = @transform_6, window_bounds = array<i64: 32, 32>}, {transform_indices = @transform_7, window_bounds = array<i64: 1>}, {transform_indices = @transform_8, window_bounds = array<i64: 8, 32>}, {transform_indices = @transform_9, window_bounds = array<i64: 2, 8>}]} {
    %c0 = arith.constant 0 : index
    %0 = memref.load %arg8[%c0] : memref<1xf32, #tpu.memory_space<smem>>
    %c0_0 = arith.constant 0 : index
    %c0_1 = arith.constant 0 : index
    %1 = vector.load %arg1[%c0_0, %c0_1] : memref<8x8xbf16, #tpu.memory_space<vmem>>, vector<8x8xbf16>
    %c0_2 = arith.constant 0 : index
    %c0_3 = arith.constant 0 : index
    %2 = vector.load %arg2[%c0_2, %c0_3] : memref<8x32xbf16, #tpu.memory_space<vmem>>, vector<8x32xbf16>
    %cst = arith.constant dense<0.000000e+00> : vector<8x32xf32>
    %3 = tpu.matmul %1, %2, %cst {dimension_numbers = #tpu.dot_dimension_numbers<[1], [0], [0], [1], [0, 0, 1, 1], [], []>} : vector<8x8xbf16>, vector<8x32xbf16>, vector<8x32xf32> -> vector<8x32xf32>
    %4 = arith.truncf %3 : vector<8x32xf32> to vector<8x32xbf16>
    %c0_4 = arith.constant 0 : index
    %c0_5 = arith.constant 0 : index
    %5 = vector.load %arg5[%c0_4, %c0_5] : memref<32x32xbf16, #tpu.memory_space<vmem>>, vector<32x32xbf16>
    %cst_6 = arith.constant dense<0.000000e+00> : vector<8x32xf32>
    %6 = tpu.matmul %4, %5, %cst_6 {dimension_numbers = #tpu.dot_dimension_numbers<[1], [0], [0], [1], [0, 0, 1, 1], [], []>} : vector<8x32xbf16>, vector<32x32xbf16>, vector<8x32xf32> -> vector<8x32xf32>
    %c0_7 = arith.constant 0 : index
    %c0_8 = arith.constant 0 : index
    %7 = vector.load %arg6[%c0_7, %c0_8] : memref<1x32xf32, #tpu.memory_space<vmem>>, vector<1x32xf32>
    %8 = vector.broadcast %7 : vector<1x32xf32> to vector<8x32xf32>
    %9 = arith.addf %6, %8 : vector<8x32xf32>
    %10 = arith.negf %9 : vector<8x32xf32>
    %11 = math.exp %10 : vector<8x32xf32>
    %cst_9 = arith.constant 1.000000e+00 : f32
    %12 = vector.broadcast %cst_9 : f32 to vector<8x32xf32>
    %13 = arith.addf %12, %11 : vector<8x32xf32>
    %14 = arith.divf %12, %13 : vector<8x32xf32>
    %15 = arith.truncf %14 : vector<8x32xf32> to vector<8x32xbf16>
    %c0_10 = arith.constant 0 : index
    %c0_11 = arith.constant 0 : index
    %16 = vector.load %arg7[%c0_10, %c0_11] : memref<32x32xbf16, #tpu.memory_space<vmem>>, vector<32x32xbf16>
    %cst_12 = arith.constant dense<0.000000e+00> : vector<8x32xf32>
    %17 = tpu.matmul %15, %16, %cst_12 {dimension_numbers = #tpu.dot_dimension_numbers<[1], [0], [0], [1], [0, 0, 1, 1], [], []>} : vector<8x32xbf16>, vector<32x32xbf16>, vector<8x32xf32> -> vector<8x32xf32>
    %c0_13 = arith.constant 0 : index
    %c0_14 = arith.constant 0 : index
    %18 = vector.load %arg3[%c0_13, %c0_14] : memref<8x32xf32, #tpu.memory_space<vmem>>, vector<8x32xf32>
    %c0_15 = arith.constant 0 : index
    %c0_16 = arith.constant 0 : index
    %19 = vector.load %arg4[%c0_15, %c0_16] : memref<8x32xf32, #tpu.memory_space<vmem>>, vector<8x32xf32>
    %20 = vector.shape_cast %18 : vector<8x32xf32> to vector<1x8x32xf32>
    %21 = vector.shape_cast %19 : vector<8x32xf32> to vector<1x8x32xf32>
    %22 = tpu.concatenate %20, %21 in 0 : vector<1x8x32xf32>, vector<1x8x32xf32> -> vector<2x8x32xf32>
    %23 = vector.shape_cast %17 : vector<8x32xf32> to vector<1x8x32xf32>
    %24 = vector.broadcast %23 : vector<1x8x32xf32> to vector<2x8x32xf32>
    %25 = arith.mulf %22, %24 : vector<2x8x32xf32>
    %cst_17 = arith.constant dense<0.000000e+00> : vector<2x8xf32>
    %26 = vector.multi_reduction <add>, %25, %cst_17 [2] : vector<2x8x32xf32> to vector<2x8xf32>
    %27 = vector.broadcast %0 : f32 to vector<2x8xf32>
    %28 = arith.addf %26, %27 : vector<2x8xf32>
    %c0_18 = arith.constant 0 : index
    %c0_19 = arith.constant 0 : index
    %29 = vector.load %arg9[%c0_18, %c0_19] : memref<8x32xf32, #tpu.memory_space<vmem>>, vector<8x32xf32>
    tpu.vector_store %arg9[%c0_18, %c0_19], %9 {strides = array<i32>} : memref<8x32xf32, #tpu.memory_space<vmem>>, vector<8x32xf32>,
    %c0_20 = arith.constant 0 : index
    %c0_21 = arith.constant 0 : index
    %30 = vector.load %arg10[%c0_20, %c0_21] : memref<2x8xf32, #tpu.memory_space<vmem>>, vector<2x8xf32>
    tpu.vector_store %arg10[%c0_20, %c0_21], %28 {strides = array<i32>} : memref<2x8xf32, #tpu.memory_space<vmem>>, vector<2x8xf32>,
    return
  }
  func.func @transform_0(%arg0: i32) -> (i32, i32) {
    %c0_i32 = arith.constant 0 : i32
    %c0_i32_0 = arith.constant 0 : i32
    return %arg0, %c0_i32 : i32, i32
  }
  func.func @transform_1(%arg0: i32) -> (i32, i32) {
    %c0_i32 = arith.constant 0 : i32
    %c0_i32_0 = arith.constant 0 : i32
    %c0_i32_1 = arith.constant 0 : i32
    return %c0_i32, %c0_i32_0 : i32, i32
  }
  func.func @transform_2(%arg0: i32) -> (i32, i32) {
    %c0_i32 = arith.constant 0 : i32
    %c0_i32_0 = arith.constant 0 : i32
    return %arg0, %c0_i32 : i32, i32
  }
  func.func @transform_3(%arg0: i32) -> (i32, i32) {
    %c0_i32 = arith.constant 0 : i32
    %c0_i32_0 = arith.constant 0 : i32
    return %arg0, %c0_i32 : i32, i32
  }
  func.func @transform_4(%arg0: i32) -> (i32, i32) {
    %c0_i32 = arith.constant 0 : i32
    %c0_i32_0 = arith.constant 0 : i32
    %c0_i32_1 = arith.constant 0 : i32
    return %c0_i32, %c0_i32_0 : i32, i32
  }
  func.func @transform_5(%arg0: i32) -> (i32, i32) {
    %c0_i32 = arith.constant 0 : i32
    %c0_i32_0 = arith.constant 0 : i32
    %c0_i32_1 = arith.constant 0 : i32
    return %c0_i32, %c0_i32_0 : i32, i32
  }
  func.func @transform_6(%arg0: i32) -> (i32, i32) {
    %c0_i32 = arith.constant 0 : i32
    %c0_i32_0 = arith.constant 0 : i32
    %c0_i32_1 = arith.constant 0 : i32
    return %c0_i32, %c0_i32_0 : i32, i32
  }
  func.func @transform_7(%arg0: i32) -> i32 {
    %c0_i32 = arith.constant 0 : i32
    %c0_i32_0 = arith.constant 0 : i32
    return %c0_i32 : i32
  }
  func.func @transform_8(%arg0: i32) -> (i32, i32) {
    %c0_i32 = arith.constant 0 : i32
    %c0_i32_0 = arith.constant 0 : i32
    return %arg0, %c0_i32 : i32, i32
  }
  func.func @transform_9(%arg0: i32) -> (i32, i32) {
    %c0_i32 = arith.constant 0 : i32
    %c0_i32_0 = arith.constant 0 : i32
    return %c0_i32, %arg0 : i32, i32
  }
}

</mosaic_0001>

<llo_original>
// kernel: index_select_forward.3
$region0: #{index_select_forward.3}
  #allocation0 [shape = 'u32[]', space=smem, size = 0x4, offset = 0x4, fixed_abs, tag = 'smem constant byte address 0x4 - core index']
  #allocation1 [shape = 'u32[72,128]{1,0:T(1,128)}', space=vmem, size = 0x9000, scoped, tag = 'internal scratch']
  #allocation2 [shape = 'f32[1]{0:T(128)S(6)}', space=smem, size = 0x200, scoped, tag = 'scoped memory for index_select_forward.3']
  %s0 = inlined_call_operand.vmem [shape: bf16[8,8], index: 0, kind: input, shape index: {}]
  %s1 = inlined_call_operand.vmem [shape: bf16[8,32], index: 1, kind: input, shape index: {}]
  %s2 = inlined_call_operand.vmem [shape: f32[8,32], index: 2, kind: input, shape index: {}]
  %s3 = inlined_call_operand.vmem [shape: f32[8,32], index: 3, kind: input, shape index: {}]
  %s4 = inlined_call_operand.vmem [shape: bf16[32,32], index: 4, kind: input, shape index: {}]
  %s5 = inlined_call_operand.vmem [shape: f32[1,32], index: 5, kind: input, shape index: {}]
  %s6 = inlined_call_operand.hbm [shape: bf16[32,32], index: 6, kind: input, shape index: {}]
  %s7 = inlined_call_operand.<no memory space> [shape: f32[1], index: 7, kind: input, shape index: {}]
  %s8 = inlined_call_operand.hbm [shape: f32[8,32], index: 8, kind: output, shape index: {0}]
  %s9 = inlined_call_operand.vmem [shape: f32[2,8], index: 9, kind: output, shape index: {1}]
  %10 = xla_tuple %s8, %s9
  %s11 = sld [smem:[#allocation0]]
  $region54: #{index_select_forward.3} parent=0
    _
  %s13 = ssub.s32 1, %s11
  %s14 = scalar_select 0, %s13, %s11
  %15 = sst [smem:[#allocation2]] %s7
  $region1: #{index_select_forward.3} parent=0
    #allocation3 [shape = 'u8[8192]{0}', space=vmem, size = 0x2000, scoped, tag = 'input window, operand 6, single buffered']
    #allocation4 [shape = 's32[1]{0}', space=sflag, size = 0x4, scoped, tag = 'scoped memory for index_select_forward.3']
    #allocation5 [shape = 's32[1]{0}', space=sflag, size = 0x4, scoped, tag = 'scoped memory for index_select_forward.3']
    #allocation6 [shape = 'u8[4096]{0}', space=vmem, size = 0x1000, scoped, tag = 'output window, operand 0, single buffered']
    %16 = vsyncpa [#allocation4], 0
    %17 = vsyncpa [#allocation5], 0
    // Predicated region
    $region2: #{index_select_forward.3} parent=1 // pred_check
      _
    $region3: #{index_select_forward.3} parent=1 // pred_check_branch
      %19 = sbr.rel (0) target = $region5
    $region4: #{index_select_forward.3} parent=1 // pred_region
      _
    $region5: #{index_select_forward.3} parent=1 // pred_fallthru
      _
    // Predicated region
    $region6: #{index_select_forward.3} parent=1 // pred_check
      _
    $region7: #{index_select_forward.3} parent=1 // pred_check_branch
      %21 = sbr.rel (0) target = $region9
    $region8: #{index_select_forward.3} parent=1 // pred_region
      _
    $region9: #{index_select_forward.3} parent=1 // pred_fallthru
      _
    // Predicated region
    $region10: #{index_select_forward.3} parent=1 // pred_check
      _
    $region11: #{index_select_forward.3} parent=1 // pred_check_branch
      %23 = sbr.rel (0) target = $region13
    $region12: #{index_select_forward.3} parent=1 // pred_region
      _
    $region13: #{index_select_forward.3} parent=1 // pred_fallthru
      _
    // Predicated region
    $region14: #{index_select_forward.3} parent=1 // pred_check
      _
    $region15: #{index_select_forward.3} parent=1 // pred_check_branch
      %25 = sbr.rel (0) target = $region17
    $region16: #{index_select_forward.3} parent=1 // pred_region
      _
    $region17: #{index_select_forward.3} parent=1 // pred_fallthru
      _
    // Predicated region
    $region18: #{index_select_forward.3} parent=1 // pred_check
      _
    $region19: #{index_select_forward.3} parent=1 // pred_check_branch
      %27 = sbr.rel (0) target = $region21
    $region20: #{index_select_forward.3} parent=1 // pred_region
      _
    $region21: #{index_select_forward.3} parent=1 // pred_fallthru
      _
    // Predicated region
    $region22: #{index_select_forward.3} parent=1 // pred_check
      _
    $region23: #{index_select_forward.3} parent=1 // pred_check_branch
      %29 = sbr.rel (0) target = $region25
    $region24: #{index_select_forward.3} parent=1 // pred_region
      _
    $region25: #{index_select_forward.3} parent=1 // pred_fallthru
      _
    // Predicated region
    $region26: #{index_select_forward.3} parent=1 // pred_check
      _
    $region27: #{index_select_forward.3} parent=1 // pred_check_branch
      %31 = sbr.rel (0) target = $region29
    $region28: #{index_select_forward.3} parent=1 // pred_region
      %33 = vsyncadd [#allocation4], 0
      %s34 = sshll.u32 %s6, 4
      %s35 = int_to_ptr.hbm [resolvable:$true] %s34
      %s36 = sshll.u32 [#allocation3], 4
      %s37 = int_to_ptr.vmem [resolvable:$true] %s36
      %42 = dma.hbm_to_vmem [thread:$0]  %s35, 256, %s37, [#allocation4], 64, 64, 4
    $region29: #{index_select_forward.3} parent=1 // pred_fallthru
      _
    // Predicated region
    $region30: #{index_select_forward.3} parent=1 // pred_check
      _
    $region31: #{index_select_forward.3} parent=1 // pred_check_branch
      %44 = sbr.rel (0) target = $region33
    $region32: #{index_select_forward.3} parent=1 // pred_region
      _
    $region33: #{index_select_forward.3} parent=1 // pred_fallthru
      _
    // Predicated region
    $region34: #{index_select_forward.3} parent=1 // pred_check
      _
    $region35: #{index_select_forward.3} parent=1 // pred_check_branch
      %46 = sbr.rel (0) target = $region37
    $region36: #{index_select_forward.3} parent=1 // pred_region
      %48 = dma.done [#allocation4], 256
    $region37: #{index_select_forward.3} parent=1 // pred_fallthru
      _
    %s50 = sld [smem:[#allocation2]]
    %v51 = vld [vmem:[%s0] sm:$0xf]
    %v52 = vld [vmem:[%s1] sm:$0xf]
    %vm53 = vcmask 64512
    %v55 = vsel %vm53, %v51, 0
    %vm57 = vcmask 1043456
    %v59 = vsel %vm57, %v52, 0
    %61 = vmatpush.bf16.msra.mxu0 0
    %62 = vmatpush.bf16.msra.mxu0 0
    %63 = vmatpush.bf16.msra.mxu0 0
    %64 = vmatpush.bf16.msra.mxu0 0
    %65 = vmatpush.bf16.msra.mxu0 0
    %66 = vmatpush.bf16.msra.mxu0 0
    %67 = vmatpush.bf16.msra.mxu0 0
    %68 = vmatpush.bf16.msra.mxu0 %v59
    %69 = vmatmul.bf16.gmra.mxu0 %v55
    %v70 = vpop.f32.mrf.mxu0
    %v71 = vadd.f32 0.0, %v70
    %v72 = vpop.f32.mrf.mxu0
    %73 = vdwg.mxu0
    %v74 = vpack.c.bf16 %v71, %v71
    %v75 = vld [vmem:[%s4] sm:$0xf]
    %v76 = vld [vmem:[%s4 + $0x4] sm:$0xf]
    %v77 = vld [vmem:[%s4 + $0x8] sm:$0xf]
    %v78 = vld [vmem:[%s4 + $0xc] sm:$0xf]
    %v79 = vld [vmem:[%s5] sm:$0x1]
    %v81 = vperm.slane %v79, 0
    %v87 = vunpack.c.l.b16 %v75
    %v88 = vunpack.c.l.b16 %v76
    %v89 = vunpack.c.l.b16 %v77
    %v90 = vunpack.c.l.b16 %v78
    %v91 = vpack.c.b16 %v88, %v87
    %v92 = vpack.c.b16 %v90, %v89
    %vm95 = vcmask 261120
    %v97 = vsel %vm95, %v74, 0
    %99 = vmatpush.bf16.msra.mxu0 0
    %100 = vmatpush.bf16.msra.mxu0 0
    %101 = vmatpush.bf16.msra.mxu0 0
    %102 = vmatpush.bf16.msra.mxu0 0
    %103 = vmatpush.bf16.msra.mxu0 0
    %104 = vmatpush.bf16.msra.mxu0 0
    %105 = vmatpush.bf16.msra.mxu0 %v92
    %106 = vmatpush.bf16.msra.mxu0 %v91
    %107 = vmatmul.bf16.gmra.mxu0 %v97
    %v108 = vpop.f32.mrf.mxu0
    %v109 = vadd.f32 %v81, %v108
    %v110 = vpop.f32.mrf.mxu0
    %111 = vdwg.mxu0
    %v112 = vxor.u32 %v109, 2147483648
    %v113 = vmul.f32 %v112, 1.442695
    %v114 = vpow.pop %v113
    %v115 = vadd.f32 %v114, 1.0
    %v116 = vrcp.pop %v115
    %v117 = vmul.f32 %v115, %v116
    %v118 = vsub.f32 1.0, %v117
    %v119 = vmul.f32 %v116, %v118
    %v120 = vadd.f32 %v116, %v119
    %vm121 = vweird.f32 %v115
    %vm122 = vweird.f32 %v116
    %vm123 = vmor %vm121, %vm122
    %v124 = vsel %vm123, %v116, %v120
    %v125 = vand.u32 2147483647, %v115
    %vm126 = vcmp.eq.f32.partialorder %v125, 8.507059e+37
    %v127 = vand.u32 %v115, 2147483648
    %v128 = vor.u32 1.1754944e-38, %v127
    %v129 = vsel %vm126, %v128, %v124
    %v130 = vmul.f32 1.0, %v129
    %v131 = vpack.c.bf16 %v130, %v130
    %v132 = vld [vmem:[#allocation3] sm:$0xf]
    %v133 = vld [vmem:[#allocation3 + $0x4] sm:$0xf]
    %v134 = vld [vmem:[#allocation3 + $0x8] sm:$0xf]
    %v135 = vld [vmem:[#allocation3 + $0xc] sm:$0xf]
    %v140 = vunpack.c.l.b16 %v132
    %v141 = vunpack.c.l.b16 %v133
    %v142 = vunpack.c.l.b16 %v134
    %v143 = vunpack.c.l.b16 %v135
    %v144 = vpack.c.b16 %v141, %v140
    %v145 = vpack.c.b16 %v143, %v142
    %v149 = vsel %vm95, %v131, 0
    %151 = vmatpush.bf16.msra.mxu0 0
    %152 = vmatpush.bf16.msra.mxu0 0
    %153 = vmatpush.bf16.msra.mxu0 0
    %154 = vmatpush.bf16.msra.mxu0 0
    %155 = vmatpush.bf16.msra.mxu0 0
    %156 = vmatpush.bf16.msra.mxu0 0
    %157 = vmatpush.bf16.msra.mxu0 %v145
    %158 = vmatpush.bf16.msra.mxu0 %v144
    %159 = vmatmul.bf16.gmra.mxu0 %v149
    %v160 = vpop.f32.mrf.mxu0
    %v161 = vadd.f32 0.0, %v160
    %v162 = vpop.f32.mrf.mxu0
    %163 = vdwg.mxu0
    %v164 = vld [vmem:[%s2] sm:$0xff]
    %v165 = vld [vmem:[%s3] sm:$0xff]
    %v166 = vmul.f32 %v164, %v161
    %v167 = vmul.f32 %v165, %v161
    %v168 = vsel %vm95, %v166, 0.0
    %169 = vadd.xlane.f32.xlu0 %v168
    %v170 = vpop.xlane.xlu0 %169
    %v171 = vsel %vm95, %v167, 0.0
    %172 = vadd.xlane.f32.xlu0 %v171
    %v173 = vpop.xlane.xlu0 %172
    %v174 = vstv %s50
    %v175 = vadd.f32 %v170, %v174
    %v176 = vadd.f32 %v173, %v174
    %177 = vst.msk [vmem:[#allocation6] sm:$0xff] %vm95, %v109
    %v180 = vlaneseq
    %v181 = vand.u32 %v180, 127
    %v182 = vperm.slane %v175, %v181
    %v183 = vperm.slane %v176, %v181
    %vm184 = vcmask 1041409
    %v185 = vsel %vm184, %v183, %v182
    %vm187 = vcmask 58368
    %188 = vst.msk [vmem:[%s9] sm:$0x3] %vm187, %v185
    // Predicated region
    $region38: #{index_select_forward.3} parent=1 // pred_check
      _
    $region39: #{index_select_forward.3} parent=1 // pred_check_branch
      %190 = sbr.rel (0) target = $region41
    $region40: #{index_select_forward.3} parent=1 // pred_region
      %192 = vsyncadd [#allocation5], 0
      %s194 = sshll.u32 [#allocation6], 4
      %s195 = int_to_ptr.vmem [resolvable:$true] %s194
      %s196 = sshll.u32 %s8, 4
      %s197 = int_to_ptr.hbm [resolvable:$true] %s196
      %199 = dma.vmem_to_hbm [thread:$0]  %s195, 128, %s197, [#allocation5]
    $region41: #{index_select_forward.3} parent=1 // pred_fallthru
      _
    // Predicated region
    $region42: #{index_select_forward.3} parent=1 // pred_check
      _
    $region43: #{index_select_forward.3} parent=1 // pred_check_branch
      %201 = sbr.rel (0) target = $region45
    $region44: #{index_select_forward.3} parent=1 // pred_region
      _
    $region45: #{index_select_forward.3} parent=1 // pred_fallthru
      _
    // Predicated region
    $region46: #{index_select_forward.3} parent=1 // pred_check
      _
    $region47: #{index_select_forward.3} parent=1 // pred_check_branch
      %203 = sbr.rel (0) target = $region49
    $region48: #{index_select_forward.3} parent=1 // pred_region
      %205 = dma.done [#allocation5], 128
    $region49: #{index_select_forward.3} parent=1 // pred_fallthru
      _
    // Predicated region
    $region50: #{index_select_forward.3} parent=1 // pred_check
      _
    $region51: #{index_select_forward.3} parent=1 // pred_check_branch
      %207 = sbr.rel (0) target = $region53
    $region52: #{index_select_forward.3} parent=1 // pred_region
      _
    $region53: #{index_select_forward.3} parent=1 // pred_fallthru
      _
    %208 = vsyncpa [#allocation4], 1
    %209 = vsyncpa [#allocation5], 1

// kernel: index_select_forward.2
$region0: #{index_select_forward.2}
  #allocation0 [shape = 'u32[]', space=smem, size = 0x4, offset = 0x4, fixed_abs, tag = 'smem constant byte address 0x4 - core index']
  #allocation1 [shape = 'u32[72,128]{1,0:T(1,128)}', space=vmem, size = 0x9000, scoped, tag = 'internal scratch']
  #allocation2 [shape = 'f32[1]{0:T(128)S(6)}', space=smem, size = 0x200, scoped, tag = 'scoped memory for index_select_forward.2']
  %s0 = inlined_call_operand.hbm [shape: f32[8,32], index: 0, kind: input, shape index: {}]
  %s1 = inlined_call_operand.hbm [shape: f32[8,32], index: 1, kind: input, shape index: {}]
  %s2 = inlined_call_operand.hbm [shape: bf16[32,32], index: 2, kind: input, shape index: {}]
  %s3 = inlined_call_operand.vmem [shape: f32[1,32], index: 3, kind: input, shape index: {}]
  %s4 = inlined_call_operand.<no memory space> [shape: f32[1], index: 4, kind: input, shape index: {}]
  %s5 = inlined_call_operand.vmem [shape: f32[8,32], index: 5, kind: output, shape index: {0}]
  %s6 = inlined_call_operand.vmem [shape: f32[8,32], index: 6, kind: output, shape index: {1}]
  %s7 = inlined_call_operand.vmem [shape: bf16[8,32], index: 7, kind: output, shape index: {2}]
  %8 = xla_tuple %s5, %s6, %s7
  %s9 = sld [smem:[#allocation0]]
  $region58: #{index_select_forward.2} parent=0
    _
  %s11 = ssub.s32 1, %s9
  %s12 = scalar_select 0, %s11, %s9
  %13 = sst [smem:[#allocation2]] %s4
  $region1: #{index_select_forward.2} parent=0
    #allocation3 [shape = 'u8[4096]{0}', space=vmem, size = 0x1000, scoped, tag = 'input window, operand 0, single buffered']
    #allocation4 [shape = 's32[1]{0}', space=sflag, size = 0x4, scoped, tag = 'scoped memory for index_select_forward.2']
    #allocation5 [shape = 'u8[4096]{0}', space=vmem, size = 0x1000, scoped, tag = 'input window, operand 1, single buffered']
    #allocation6 [shape = 's32[1]{0}', space=sflag, size = 0x4, scoped, tag = 'scoped memory for index_select_forward.2']
    #allocation7 [shape = 'u8[8192]{0}', space=vmem, size = 0x2000, scoped, tag = 'input window, operand 2, single buffered']
    %14 = vsyncpa [#allocation4], 0
    %15 = vsyncpa [#allocation6], 0
    // Predicated region
    $region2: #{index_select_forward.2} parent=1 // pred_check
      _
    $region3: #{index_select_forward.2} parent=1 // pred_check_branch
      %17 = sbr.rel (0) target = $region5
    $region4: #{index_select_forward.2} parent=1 // pred_region
      %19 = vsyncadd [#allocation4], 0
      %s21 = sshll.u32 %s0, 4
      %s22 = int_to_ptr.hbm [resolvable:$true] %s21
      %s23 = sshll.u32 [#allocation3], 4
      %s24 = int_to_ptr.vmem [resolvable:$true] %s23
      %26 = dma.hbm_to_vmem [thread:$0]  %s22, 128, %s24, [#allocation4]
    $region5: #{index_select_forward.2} parent=1 // pred_fallthru
      _
    // Predicated region
    $region6: #{index_select_forward.2} parent=1 // pred_check
      _
    $region7: #{index_select_forward.2} parent=1 // pred_check_branch
      %28 = sbr.rel (0) target = $region9
    $region8: #{index_select_forward.2} parent=1 // pred_region
      %30 = vsyncadd [#allocation6], 0
      %s32 = sshll.u32 %s1, 4
      %s33 = int_to_ptr.hbm [resolvable:$true] %s32
      %s34 = sshll.u32 [#allocation5], 4
      %s35 = int_to_ptr.vmem [resolvable:$true] %s34
      %37 = dma.hbm_to_vmem [thread:$0]  %s33, 128, %s35, [#allocation6]
    $region9: #{index_select_forward.2} parent=1 // pred_fallthru
      _
    // Predicated region
    $region10: #{index_select_forward.2} parent=1 // pred_check
      _
    $region11: #{index_select_forward.2} parent=1 // pred_check_branch
      %39 = sbr.rel (0) target = $region13
    $region12: #{index_select_forward.2} parent=1 // pred_region
      %41 = vsyncadd [#allocation6], 0
      %s42 = sshll.u32 %s2, 4
      %s43 = int_to_ptr.hbm [resolvable:$true] %s42
      %s44 = sshll.u32 [#allocation7], 4
      %s45 = int_to_ptr.vmem [resolvable:$true] %s44
      %50 = dma.hbm_to_vmem [thread:$0]  %s43, 256, %s45, [#allocation6], 64, 64, 4
    $region13: #{index_select_forward.2} parent=1 // pred_fallthru
      _
    // Predicated region
    $region14: #{index_select_forward.2} parent=1 // pred_check
      _
    $region15: #{index_select_forward.2} parent=1 // pred_check_branch
      %52 = sbr.rel (0) target = $region17
    $region16: #{index_select_forward.2} parent=1 // pred_region
      _
    $region17: #{index_select_forward.2} parent=1 // pred_fallthru
      _
    // Predicated region
    $region18: #{index_select_forward.2} parent=1 // pred_check
      _
    $region19: #{index_select_forward.2} parent=1 // pred_check_branch
      %54 = sbr.rel (0) target = $region21
    $region20: #{index_select_forward.2} parent=1 // pred_region
      _
    $region21: #{index_select_forward.2} parent=1 // pred_fallthru
      _
    // Predicated region
    $region22: #{index_select_forward.2} parent=1 // pred_check
      _
    $region23: #{index_select_forward.2} parent=1 // pred_check_branch
      %56 = sbr.rel (0) target = $region25
    $region24: #{index_select_forward.2} parent=1 // pred_region
      %58 = dma.done [#allocation4], 128
    $region25: #{index_select_forward.2} parent=1 // pred_fallthru
      _
    // Predicated region
    $region26: #{index_select_forward.2} parent=1 // pred_check
      _
    $region27: #{index_select_forward.2} parent=1 // pred_check_branch
      %60 = sbr.rel (0) target = $region29
    $region28: #{index_select_forward.2} parent=1 // pred_region
      %62 = dma.done [#allocation6], 128
    $region29: #{index_select_forward.2} parent=1 // pred_fallthru
      _
    // Predicated region
    $region30: #{index_select_forward.2} parent=1 // pred_check
      _
    $region31: #{index_select_forward.2} parent=1 // pred_check_branch
      %64 = sbr.rel (0) target = $region33
    $region32: #{index_select_forward.2} parent=1 // pred_region
      %66 = dma.done [#allocation6], 256
    $region33: #{index_select_forward.2} parent=1 // pred_fallthru
      _
    %s68 = sld [smem:[#allocation2]]
    %v69 = vld [vmem:[#allocation3] sm:$0xff]
    %v70 = vld [vmem:[#allocation5] sm:$0xff]
    %v71 = vpack.c.bf16 %v70, %v69
    %v72 = vld [vmem:[#allocation7] sm:$0xf]
    %v73 = vld [vmem:[#allocation7 + $0x4] sm:$0xf]
    %v74 = vld [vmem:[#allocation7 + $0x8] sm:$0xf]
    %v75 = vld [vmem:[#allocation7 + $0xc] sm:$0xf]
    %v76 = vld [vmem:[%s3] sm:$0x1]
    %v78 = vperm.slane %v76, 0
    %v84 = vunpack.c.l.b16 %v72
    %v85 = vunpack.c.l.b16 %v73
    %v86 = vunpack.c.l.b16 %v74
    %v87 = vunpack.c.l.b16 %v75
    %v88 = vpack.c.b16 %v85, %v84
    %v89 = vpack.c.b16 %v87, %v86
    %vm92 = vcmask 261120
    %v94 = vsel %vm92, %v71, 0
    %96 = vmatpush.bf16.msra.mxu0 0
    %97 = vmatpush.bf16.msra.mxu0 0
    %98 = vmatpush.bf16.msra.mxu0 0
    %99 = vmatpush.bf16.msra.mxu0 0
    %100 = vmatpush.bf16.msra.mxu0 0
    %101 = vmatpush.bf16.msra.mxu0 0
    %102 = vmatpush.bf16.msra.mxu0 %v89
    %103 = vmatpush.bf16.msra.mxu0 %v88
    %104 = vmatmul.bf16.gmra.mxu0 %v94
    %v105 = vpop.f32.mrf.mxu0
    %v106 = vadd.f32 %v78, %v105
    %v107 = vpop.f32.mrf.mxu0
    %v108 = vadd.f32 %v78, %v107
    %109 = vdwg.mxu0
    %vm110 = vcmp.gt.f32.partialorder %v106, 0.0
    %vm111 = vcmp.gt.f32.partialorder %v108, 0.0
    %v112 = vstv %s68
    %v113 = vmul.f32 %v112, %v106
    %v114 = vmul.f32 %v112, %v108
    %v115 = vsel %vm110, %v106, %v113
    %v116 = vsel %vm111, %v108, %v114
    %117 = vst.msk [vmem:[%s5] sm:$0xff] %vm92, %v115
    %118 = vst.msk [vmem:[%s6] sm:$0xff] %vm92, %v116
    %v119 = vpack.c.bf16 %v115, %v115
    %vm120 = vcmask 257024
    %121 = vst.msk [vmem:[%s7] sm:$0xf] %vm120, %v119
    // Predicated region
    $region34: #{index_select_forward.2} parent=1 // pred_check
      _
    $region35: #{index_select_forward.2} parent=1 // pred_check_branch
      %123 = sbr.rel (0) target = $region37
    $region36: #{index_select_forward.2} parent=1 // pred_region
      _
    $region37: #{index_select_forward.2} parent=1 // pred_fallthru
      _
    // Predicated region
    $region38: #{index_select_forward.2} parent=1 // pred_check
      _
    $region39: #{index_select_forward.2} parent=1 // pred_check_branch
      %125 = sbr.rel (0) target = $region41
    $region40: #{index_select_forward.2} parent=1 // pred_region
      _
    $region41: #{index_select_forward.2} parent=1 // pred_fallthru
      _
    // Predicated region
    $region42: #{index_select_forward.2} parent=1 // pred_check
      _
    $region43: #{index_select_forward.2} parent=1 // pred_check_branch
      %127 = sbr.rel (0) target = $region45
    $region44: #{index_select_forward.2} parent=1 // pred_region
      _
    $region45: #{index_select_forward.2} parent=1 // pred_fallthru
      _
    // Predicated region
    $region46: #{index_select_forward.2} parent=1 // pred_check
      _
    $region47: #{index_select_forward.2} parent=1 // pred_check_branch
      %129 = sbr.rel (0) target = $region49
    $region48: #{index_select_forward.2} parent=1 // pred_region
      _
    $region49: #{index_select_forward.2} parent=1 // pred_fallthru
      _
    // Predicated region
    $region50: #{index_select_forward.2} parent=1 // pred_check
      _
    $region51: #{index_select_forward.2} parent=1 // pred_check_branch
      %131 = sbr.rel (0) target = $region53
    $region52: #{index_select_forward.2} parent=1 // pred_region
      _
    $region53: #{index_select_forward.2} parent=1 // pred_fallthru
      _
    // Predicated region
    $region54: #{index_select_forward.2} parent=1 // pred_check
      _
    $region55: #{index_select_forward.2} parent=1 // pred_check_branch
      %133 = sbr.rel (0) target = $region57
    $region56: #{index_select_forward.2} parent=1 // pred_region
      _
    $region57: #{index_select_forward.2} parent=1 // pred_fallthru
      _
    %134 = vsyncpa [#allocation4], 1
    %135 = vsyncpa [#allocation6], 1

</llo_original>
